<compile_context>
chip_gen: v6e
topology: v6e:2x2x1
jax: 0.10.0
libtpu: 0.0.40
codegen_flags: <defaults>
</compile_context>

<pallas_src>
import functools
import math

import jax
import jax.numpy as jnp
from jax import lax
from jax.experimental import pallas as pl
from jax.experimental.pallas import tpu as pltpu

# ----- small synthetic sizes consistent with the module's structure -----
B = 2            # batch (CFG.batch_size)
C_IN = 4         # input image channels
H = W = 16       # spatial
FEAT = 32        # backbone output channels ("in_features"; 1792 for efficientnet-b4)
FC_DIM = 32      # fc_dim (512 in CFG)
N_CLASSES = 128  # CFG.classes = 11014; small synthetic lane-multiple
MARGIN = 0.5
SCALE = 30.0
BN_EPS = 1e-5
DROPOUT_P = 0.1

COS_M = math.cos(MARGIN)
SIN_M = math.sin(MARGIN)
TH = math.cos(math.pi - MARGIN)
MM = math.sin(math.pi - MARGIN) * MARGIN

# whole-array-in-VMEM specs (no grid; every tensor is tiny and fits comfortably)
_VMEM = pl.BlockSpec(memory_space=pltpu.MemorySpace.VMEM)


def shopee_fused_kernel(batch, x_ref, wc_ref, avg_ref, drop_ref, wcls_ref,
                        head_ref, wa_ref, label_ref, logits_ref, loss_ref):
    """Fused forward.

    batch:      python int            - real batch size (pad rows are masked out)
    x_ref:      (C_IN+1, B*H*W) f32   - image (channels->sublanes) + ones row (conv bias)
    wc_ref:     (FEAT, C_IN+1) f32    - backbone stand-in 1x1-conv weight | bias column
    avg_ref:    (B*H*W, B_PAD) f32    - constant AdaptiveAvgPool2d averaging matrix
    drop_ref:   (B_PAD, FEAT) f32     - dropout keep/(1-p) scale mask (0 for pad rows)
    wcls_ref:   (FEAT, FC_DIM) f32    - classifier weight (pre-transposed)
    head_ref:   (3, FC_DIM) f32       - rows: [classifier bias; bn gamma; bn beta]
    wa_ref:     (FC_DIM, N_CLASSES) f32 - ArcFace weight (pre-transposed)
    label_ref:  (B_PAD, 1) i32        - labels, -1 for pad rows
    logits_ref: (B_PAD, N_CLASSES) f32
    loss_ref:   (1, N_CLASSES) f32    - mean CE loss broadcast along a lane-dense row
    """
    # ---- backbone stand-in: 1x1 conv (+bias via ones row) + ReLU, on the MXU ----
    # TODO(synk): real backbone is pretrained timm tf_efficientnet_b4; replaced by a
    # deterministic 1x1-conv + ReLU stand-in producing FEAT channels.
    y = jnp.maximum(
        jnp.dot(wc_ref[...], x_ref[...], preferred_element_type=jnp.float32),
        0.0)                                                   # (FEAT, B*HW), lane-dense

    # ---- AdaptiveAvgPool2d(1): MXU matmul; contraction dim stays on y's lanes ----
    pooled_fb = jnp.dot(y, avg_ref[...],
                        preferred_element_type=jnp.float32)    # (FEAT, B_PAD)
    pooled = pooled_fb.T                                       # tiny (B_PAD, FEAT) transpose

    # ---- Dropout(p=0.1), training mode (scale mask precomputed; pad rows -> 0) ----
    z = pooled * drop_ref[...]

    # ---- self.classifier: Linear(in_features, fc_dim) ----
    bcls = head_ref[0:1, :]
    gamma = head_ref[1:2, :]
    beta = head_ref[2:3, :]
    h = jnp.dot(z, wcls_ref[...], preferred_element_type=jnp.float32) + bcls

    # ---- self.bn: BatchNorm1d, training mode -> biased batch stats over real rows ----
    # TODO(synk): running_mean/running_var state updates are not modeled (pure forward).
    b_pad = h.shape[0]
    valid = (lax.broadcasted_iota(jnp.int32, (b_pad, 1), 0) < batch).astype(jnp.float32)
    inv_b = jnp.float32(1.0 / batch)
    mu = jnp.sum(h * valid, axis=0, keepdims=True) * inv_b
    dev = (h - mu) * valid
    var = jnp.sum(dev * dev, axis=0, keepdims=True) * inv_b
    feat = (h - mu) * lax.rsqrt(var + BN_EPS) * gamma + beta

    # ---- ArcMarginProduct: both L2 normalizations folded past the MXU matmul ----
    wa = wa_ref[...]                                           # (FC_DIM, N_CLASSES)
    raw = jnp.dot(feat, wa, preferred_element_type=jnp.float32)       # (B_PAD, N_CLASSES)
    inv_f = lax.rsqrt(jnp.maximum(jnp.sum(feat * feat, axis=1, keepdims=True), 1e-24))
    inv_w = lax.rsqrt(jnp.maximum(jnp.sum(wa * wa, axis=0, keepdims=True), 1e-24))
    cosine = raw * inv_f * inv_w

    sine = jnp.sqrt(jnp.maximum(1.0 - cosine * cosine, 0.0))   # clamp avoids NaN at |cos|~1
    phi = cosine * COS_M - sine * SIN_M
    phi = jnp.where(cosine > TH, phi, cosine - MM)             # easy_margin=False

    labels = label_ref[...]                                    # (B_PAD, 1), -1 on pad rows
    cls_ids = lax.broadcasted_iota(jnp.int32, cosine.shape, 1)
    one_hot = (cls_ids == labels).astype(jnp.float32)          # scatter_(1, label, 1)

    out = (one_hot * phi + (1.0 - one_hot) * cosine) * SCALE
    logits_ref[...] = out                                      # full (8,128) lane-dense store

    # ---- nn.CrossEntropyLoss() (mean over real rows) ----
    m = jnp.max(out, axis=1, keepdims=True)
    lse = m + jnp.log(jnp.sum(jnp.exp(out - m), axis=1, keepdims=True))
    tgt = jnp.sum(out * one_hot, axis=1, keepdims=True)
    per_row = (lse - tgt) * valid                              # pad rows contribute 0
    mean_loss = jnp.sum(per_row, axis=0, keepdims=True) * inv_b
    loss_ref[...] = jnp.broadcast_to(mean_loss, loss_ref.shape)


def init_params(key):
    k1, k2, k3 = jax.random.split(key, 3)
    # backbone stand-in 1x1 conv (stored (FEAT, C_IN) for the lane-dense orientation)
    conv_w = jax.random.normal(k1, (FEAT, C_IN), jnp.float32) * math.sqrt(2.0 / C_IN)
    conv_b = jnp.zeros((FEAT, 1), jnp.float32)
    # classifier: xavier_normal_ weight, zero bias (stored transposed: (FEAT, FC_DIM))
    w_cls = jax.random.normal(k2, (FEAT, FC_DIM), jnp.float32) * math.sqrt(2.0 / (FEAT + FC_DIM))
    b_cls = jnp.zeros((1, FC_DIM), jnp.float32)
    # bn: weight=1, bias=0
    gamma = jnp.ones((1, FC_DIM), jnp.float32)
    beta = jnp.zeros((1, FC_DIM), jnp.float32)
    # ArcMarginProduct weight (N_CLASSES, FC_DIM), xavier_uniform_, stored transposed
    limit = math.sqrt(6.0 / (N_CLASSES + FC_DIM))
    w_arc_t = jax.random.uniform(k3, (FC_DIM, N_CLASSES), jnp.float32, -limit, limit)
    return dict(conv_w=conv_w, conv_b=conv_b, w_cls=w_cls, b_cls=b_cls,
                gamma=gamma, beta=beta, w_arc_t=w_arc_t)


@jax.jit
def shopee_forward(x_nchw, label, params, drop_key):
    b, c, h, w = x_nchw.shape
    hw = h * w
    bhw = b * hw
    b_pad = max(8, ((b + 7) // 8) * 8)      # pad batch to the f32 sublane quantum
    n_feat = params['conv_w'].shape[0]

    # NCHW -> (C, B*H*W); append a ones row so the conv bias rides the same matmul.
    # TODO(synk): at real resolutions fold this transpose into the input BlockSpec.
    x_cs = jnp.transpose(x_nchw, (1, 0, 2, 3)).reshape(c, bhw)
    x_aug = jnp.concatenate([x_cs, jnp.ones((1, bhw), x_cs.dtype)], axis=0)
    wc_aug = jnp.concatenate([params['conv_w'], params['conv_b']], axis=1)

    # Constant AdaptiveAvgPool2d(1) averaging matrix (B*HW, B_PAD); pad columns are zero.
    rows = jnp.arange(bhw, dtype=jnp.int32)[:, None]
    cols = jnp.arange(b_pad, dtype=jnp.int32)[None, :]
    avg_t = jnp.where((rows // hw == cols) & (cols < b),
                      jnp.float32(1.0 / hw), jnp.float32(0.0))

    # Dropout(p=0.1) training-mode keep/(1-p) scale mask (exact p; pad rows zero).
    keep = jax.random.bernoulli(drop_key, 1.0 - DROPOUT_P, (b, n_feat))
    dscale = keep.astype(jnp.float32) * jnp.float32(1.0 / (1.0 - DROPOUT_P))
    dscale = jnp.pad(dscale, ((0, b_pad - b), (0, 0)))

    # Coalesce the three tiny (1, FC_DIM) head params into one slab.
    head = jnp.concatenate([params['b_cls'], params['gamma'], params['beta']], axis=0)

    label_pad = jnp.pad(label.astype(jnp.int32), (0, b_pad - b),
                        constant_values=-1).reshape(b_pad, 1)

    logits_pad, loss_row = pl.pallas_call(
        functools.partial(shopee_fused_kernel, b),
        out_shape=(jax.ShapeDtypeStruct((b_pad, N_CLASSES), jnp.float32),
                   jax.ShapeDtypeStruct((1, N_CLASSES), jnp.float32)),
        in_specs=[_VMEM] * 8,
        out_specs=(_VMEM, _VMEM),
    )(x_aug, wc_aug, avg_t, dscale, params['w_cls'], head, params['w_arc_t'],
      label_pad)
    return logits_pad[:b], loss_row[0, 0]


if __name__ == "__main__":
    key = jax.random.PRNGKey(0)
    kx, kl, kp, kd = jax.random.split(key, 4)
    x = jax.random.normal(kx, (B, C_IN, H, W), jnp.float32)
    label = jax.random.randint(kl, (B,), 0, N_CLASSES, dtype=jnp.int32)
    params = init_params(kp)

    logits, loss = shopee_forward(x, label, params, kd)
    jax.block_until_ready((logits, loss))

    assert logits.shape == (B, N_CLASSES)
    assert bool(jnp.isfinite(loss))
    print("KERNEL_OK")
</pallas_src>

<mosaic_0001>
module attributes {stable_mosaic.version = 11 : i64} {
  func.func @shopee_fused_kernel(%arg0: memref<5x512xf32, #tpu.memory_space<vmem>>, %arg1: memref<32x5xf32, #tpu.memory_space<vmem>>, %arg2: memref<512x8xf32, #tpu.memory_space<vmem>>, %arg3: memref<8x32xf32, #tpu.memory_space<vmem>>, %arg4: memref<32x32xf32, #tpu.memory_space<vmem>>, %arg5: memref<3x32xf32, #tpu.memory_space<vmem>>, %arg6: memref<32x128xf32, #tpu.memory_space<vmem>>, %arg7: memref<8x1xi32, #tpu.memory_space<vmem>>, %arg8: memref<8x128xf32, #tpu.memory_space<vmem>>, %arg9: memref<1x128xf32, #tpu.memory_space<vmem>>) attributes {dimension_semantics = [], scalar_prefetch = 0 : i64, scratch_operands = 0 : i64, tpu.core_type = #tpu.core_type<tc>} {
    %c0 = arith.constant 0 : index
    %c0_0 = arith.constant 0 : index
    %0 = vector.load %arg1[%c0, %c0_0] : memref<32x5xf32, #tpu.memory_space<vmem>>, vector<32x5xf32>
    %c0_1 = arith.constant 0 : index
    %c0_2 = arith.constant 0 : index
    %1 = vector.load %arg0[%c0_1, %c0_2] : memref<5x512xf32, #tpu.memory_space<vmem>>, vector<5x512xf32>
    %cst = arith.constant dense<0.000000e+00> : vector<32x512xf32>
    %2 = tpu.matmul %0, %1, %cst {dimension_numbers = #tpu.dot_dimension_numbers<[1], [0], [0], [1], [0, 0, 1, 1], [], []>} : vector<32x5xf32>, vector<5x512xf32>, vector<32x512xf32> -> vector<32x512xf32>
    %cst_3 = arith.constant 0.000000e+00 : f32
    %3 = vector.broadcast %cst_3 : f32 to vector<32x512xf32>
    %4 = arith.maximumf %2, %3 : vector<32x512xf32>
    %c0_4 = arith.constant 0 : index
    %c0_5 = arith.constant 0 : index
    %5 = vector.load %arg2[%c0_4, %c0_5] : memref<512x8xf32, #tpu.memory_space<vmem>>, vector<512x8xf32>
    %cst_6 = arith.constant dense<0.000000e+00> : vector<32x8xf32>
    %6 = tpu.matmul %4, %5, %cst_6 {dimension_numbers = #tpu.dot_dimension_numbers<[1], [0], [0], [1], [0, 0, 1, 1], [], []>} : vector<32x512xf32>, vector<512x8xf32>, vector<32x8xf32> -> vector<32x8xf32>
    %7 = tpu.transpose %6, [1, 0] : vector<32x8xf32> -> vector<8x32xf32>
    %c0_7 = arith.constant 0 : index
    %c0_8 = arith.constant 0 : index
    %8 = vector.load %arg3[%c0_7, %c0_8] : memref<8x32xf32, #tpu.memory_space<vmem>>, vector<8x32xf32>
    %9 = arith.mulf %7, %8 : vector<8x32xf32>
    %c0_9 = arith.constant 0 : index
    %c0_10 = arith.constant 0 : index
    %10 = vector.load %arg5[%c0_9, %c0_10] : memref<3x32xf32, #tpu.memory_space<vmem>>, vector<1x32xf32>
    %c1 = arith.constant 1 : index
    %c0_11 = arith.constant 0 : index
    %11 = vector.load %arg5[%c1, %c0_11] : memref<3x32xf32, #tpu.memory_space<vmem>>, vector<1x32xf32>
    %c2 = arith.constant 2 : index
    %c0_12 = arith.constant 0 : index
    %12 = vector.load %arg5[%c2, %c0_12] : memref<3x32xf32, #tpu.memory_space<vmem>>, vector<1x32xf32>
    %c0_13 = arith.constant 0 : index
    %c0_14 = arith.constant 0 : index
    %13 = vector.load %arg4[%c0_13, %c0_14] : memref<32x32xf32, #tpu.memory_space<vmem>>, vector<32x32xf32>
    %cst_15 = arith.constant dense<0.000000e+00> : vector<8x32xf32>
    %14 = tpu.matmul %9, %13, %cst_15 {dimension_numbers = #tpu.dot_dimension_numbers<[1], [0], [0], [1], [0, 0, 1, 1], [], []>} : vector<8x32xf32>, vector<32x32xf32>, vector<8x32xf32> -> vector<8x32xf32>
    %15 = vector.broadcast %10 : vector<1x32xf32> to vector<8x32xf32>
    %16 = arith.addf %14, %15 : vector<8x32xf32>
    %17 = tpu.iota {dimensions = array<i32: 0>} : vector<8x1xi32>
    %c2_i32 = arith.constant 2 : i32
    %18 = vector.broadcast %c2_i32 : i32 to vector<8x1xi32>
    %19 = arith.cmpi slt, %17, %18 : vector<8x1xi32>
    %20 = arith.extui %19 : vector<8x1xi1> to vector<8x1xi32>
    %21 = arith.sitofp %20 : vector<8x1xi32> to vector<8x1xf32>
    %22 = vector.broadcast %21 : vector<8x1xf32> to vector<8x32xf32>
    %23 = arith.mulf %16, %22 : vector<8x32xf32>
    %cst_16 = arith.constant dense<0.000000e+00> : vector<32xf32>
    %24 = vector.multi_reduction <add>, %23, %cst_16 [0] : vector<8x32xf32> to vector<32xf32>
    %25 = vector.shape_cast %24 : vector<32xf32> to vector<1x32xf32>
    %cst_17 = arith.constant 5.000000e-01 : f32
    %26 = vector.broadcast %cst_17 : f32 to vector<1x32xf32>
    %27 = arith.mulf %25, %26 : vector<1x32xf32>
    %28 = vector.broadcast %27 : vector<1x32xf32> to vector<8x32xf32>
    %29 = arith.subf %16, %28 : vector<8x32xf32>
    %30 = vector.broadcast %21 : vector<8x1xf32> to vector<8x32xf32>
    %31 = arith.mulf %29, %30 : vector<8x32xf32>
    %32 = arith.mulf %31, %31 : vector<8x32xf32>
    %cst_18 = arith.constant dense<0.000000e+00> : vector<32xf32>
    %33 = vector.multi_reduction <add>, %32, %cst_18 [0] : vector<8x32xf32> to vector<32xf32>
    %34 = vector.shape_cast %33 : vector<32xf32> to vector<1x32xf32>
    %cst_19 = arith.constant 5.000000e-01 : f32
    %35 = vector.broadcast %cst_19 : f32 to vector<1x32xf32>
    %36 = arith.mulf %34, %35 : vector<1x32xf32>
    %37 = vector.broadcast %27 : vector<1x32xf32> to vector<8x32xf32>
    %38 = arith.subf %16, %37 : vector<8x32xf32>
    %cst_20 = arith.constant 9.99999974E-6 : f32
    %39 = vector.broadcast %cst_20 : f32 to vector<1x32xf32>
    %40 = arith.addf %36, %39 : vector<1x32xf32>
    %41 = math.rsqrt %40 : vector<1x32xf32>
    %42 = vector.broadcast %41 : vector<1x32xf32> to vector<8x32xf32>
    %43 = arith.mulf %38, %42 : vector<8x32xf32>
    %44 = vector.broadcast %11 : vector<1x32xf32> to vector<8x32xf32>
    %45 = arith.mulf %43, %44 : vector<8x32xf32>
    %46 = vector.broadcast %12 : vector<1x32xf32> to vector<8x32xf32>
    %47 = arith.addf %45, %46 : vector<8x32xf32>
    %c0_21 = arith.constant 0 : index
    %c0_22 = arith.constant 0 : index
    %48 = vector.load %arg6[%c0_21, %c0_22] : memref<32x128xf32, #tpu.memory_space<vmem>>, vector<32x128xf32>
    %cst_23 = arith.constant dense<0.000000e+00> : vector<8x128xf32>
    %49 = tpu.matmul %47, %48, %cst_23 {dimension_numbers = #tpu.dot_dimension_numbers<[1], [0], [0], [1], [0, 0, 1, 1], [], []>} : vector<8x32xf32>, vector<32x128xf32>, vector<8x128xf32> -> vector<8x128xf32>
    %50 = arith.mulf %47, %47 : vector<8x32xf32>
    %cst_24 = arith.constant dense<0.000000e+00> : vector<8xf32>
    %51 = vector.multi_reduction <add>, %50, %cst_24 [1] : vector<8x32xf32> to vector<8xf32>
    %52 = vector.shape_cast %51 : vector<8xf32> to vector<8x1xf32>
    %cst_25 = arith.constant 1.000000e-24 : f32
    %53 = vector.broadcast %cst_25 : f32 to vector<8x1xf32>
    %54 = arith.maximumf %52, %53 : vector<8x1xf32>
    %55 = math.rsqrt %54 : vector<8x1xf32>
    %56 = arith.mulf %48, %48 : vector<32x128xf32>
    %cst_26 = arith.constant dense<0.000000e+00> : vector<128xf32>
    %57 = vector.multi_reduction <add>, %56, %cst_26 [0] : vector<32x128xf32> to vector<128xf32>
    %58 = vector.shape_cast %57 : vector<128xf32> to vector<1x128xf32>
    %cst_27 = arith.constant 1.000000e-24 : f32
    %59 = vector.broadcast %cst_27 : f32 to vector<1x128xf32>
    %60 = arith.maximumf %58, %59 : vector<1x128xf32>
    %61 = math.rsqrt %60 : vector<1x128xf32>
    %62 = vector.broadcast %55 : vector<8x1xf32> to vector<8x128xf32>
    %63 = arith.mulf %49, %62 : vector<8x128xf32>
    %64 = vector.broadcast %61 : vector<1x128xf32> to vector<8x128xf32>
    %65 = arith.mulf %63, %64 : vector<8x128xf32>
    %66 = arith.mulf %65, %65 : vector<8x128xf32>
    %cst_28 = arith.constant 1.000000e+00 : f32
    %67 = vector.broadcast %cst_28 : f32 to vector<8x128xf32>
    %68 = arith.subf %67, %66 : vector<8x128xf32>
    %cst_29 = arith.constant 0.000000e+00 : f32
    %69 = vector.broadcast %cst_29 : f32 to vector<8x128xf32>
    %70 = arith.maximumf %68, %69 : vector<8x128xf32>
    %71 = math.sqrt %70 : vector<8x128xf32>
    %cst_30 = arith.constant 0.87758255 : f32
    %72 = vector.broadcast %cst_30 : f32 to vector<8x128xf32>
    %73 = arith.mulf %65, %72 : vector<8x128xf32>
    %cst_31 = arith.constant 0.47942555 : f32
    %74 = vector.broadcast %cst_31 : f32 to vector<8x128xf32>
    %75 = arith.mulf %71, %74 : vector<8x128xf32>
    %76 = arith.subf %73, %75 : vector<8x128xf32>
    %cst_32 = arith.constant -0.87758255 : f32
    %77 = vector.broadcast %cst_32 : f32 to vector<8x128xf32>
    %78 = arith.cmpf ogt, %65, %77 : vector<8x128xf32>
    %cst_33 = arith.constant 0.239712775 : f32
    %79 = vector.broadcast %cst_33 : f32 to vector<8x128xf32>
    %80 = arith.subf %65, %79 : vector<8x128xf32>
    %81 = arith.select %78, %76, %80 : vector<8x128xi1>, vector<8x128xf32>
    %c0_34 = arith.constant 0 : index
    %c0_35 = arith.constant 0 : index
    %82 = vector.load %arg7[%c0_34, %c0_35] : memref<8x1xi32, #tpu.memory_space<vmem>>, vector<8x1xi32>
    %83 = tpu.iota {dimensions = array<i32: 1>} : vector<8x128xi32>
    %84 = vector.broadcast %82 : vector<8x1xi32> to vector<8x128xi32>
    %85 = arith.cmpi eq, %83, %84 : vector<8x128xi32>
    %86 = arith.extui %85 : vector<8x128xi1> to vector<8x128xi32>
    %87 = arith.sitofp %86 : vector<8x128xi32> to vector<8x128xf32>
    %88 = arith.mulf %87, %81 : vector<8x128xf32>
    %cst_36 = arith.constant 1.000000e+00 : f32
    %89 = vector.broadcast %cst_36 : f32 to vector<8x128xf32>
    %90 = arith.subf %89, %87 : vector<8x128xf32>
    %91 = arith.mulf %90, %65 : vector<8x128xf32>
    %92 = arith.addf %88, %91 : vector<8x128xf32>
    %cst_37 = arith.constant 3.000000e+01 : f32
    %93 = vector.broadcast %cst_37 : f32 to vector<8x128xf32>
    %94 = arith.mulf %92, %93 : vector<8x128xf32>
    %c0_38 = arith.constant 0 : index
    %c0_39 = arith.constant 0 : index
    %95 = vector.load %arg8[%c0_38, %c0_39] : memref<8x128xf32, #tpu.memory_space<vmem>>, vector<8x128xf32>
    tpu.vector_store %arg8[%c0_38, %c0_39], %94 {strides = array<i32>} : memref<8x128xf32, #tpu.memory_space<vmem>>, vector<8x128xf32>,
    %cst_40 = arith.constant dense<0xFF800000> : vector<8xf32>
    %96 = vector.multi_reduction <maximumf>, %94, %cst_40 [1] : vector<8x128xf32> to vector<8xf32>
    %97 = vector.shape_cast %96 : vector<8xf32> to vector<8x1xf32>
    %98 = vector.broadcast %97 : vector<8x1xf32> to vector<8x128xf32>
    %99 = arith.subf %94, %98 : vector<8x128xf32>
    %100 = math.exp %99 : vector<8x128xf32>
    %cst_41 = arith.constant dense<0.000000e+00> : vector<8xf32>
    %101 = vector.multi_reduction <add>, %100, %cst_41 [1] : vector<8x128xf32> to vector<8xf32>
    %102 = vector.shape_cast %101 : vector<8xf32> to vector<8x1xf32>
    %103 = math.log %102 : vector<8x1xf32>
    %104 = arith.addf %97, %103 : vector<8x1xf32>
    %105 = arith.mulf %94, %87 : vector<8x128xf32>
    %cst_42 = arith.constant dense<0.000000e+00> : vector<8xf32>
    %106 = vector.multi_reduction <add>, %105, %cst_42 [1] : vector<8x128xf32> to vector<8xf32>
    %107 = vector.shape_cast %106 : vector<8xf32> to vector<8x1xf32>
    %108 = arith.subf %104, %107 : vector<8x1xf32>
    %109 = arith.mulf %108, %21 : vector<8x1xf32>
    %cst_43 = arith.constant dense<0.000000e+00> : vector<1xf32>
    %110 = vector.multi_reduction <add>, %109, %cst_43 [0] : vector<8x1xf32> to vector<1xf32>
    %111 = vector.shape_cast %110 : vector<1xf32> to vector<1x1xf32>
    %cst_44 = arith.constant 5.000000e-01 : f32
    %112 = vector.broadcast %cst_44 : f32 to vector<1x1xf32>
    %113 = arith.mulf %111, %112 : vector<1x1xf32>
    %114 = vector.shape_cast %113 : vector<1x1xf32> to vector<1x1xf32>
    %115 = vector.broadcast %114 : vector<1x1xf32> to vector<1x128xf32>
    %c0_45 = arith.constant 0 : index
    %c0_46 = arith.constant 0 : index
    %116 = vector.load %arg9[%c0_45, %c0_46] : memref<1x128xf32, #tpu.memory_space<vmem>>, vector<1x128xf32>
    tpu.vector_store %arg9[%c0_45, %c0_46], %115 {strides = array<i32>} : memref<1x128xf32, #tpu.memory_space<vmem>>, vector<1x128xf32>,
    return
  }
}

</mosaic_0001>

<llo_original>
// kernel: shopee_forward.1
$region0: #{shopee_forward.1}
  #allocation0 [shape = 'u32[]', space=smem, size = 0x4, offset = 0x4, fixed_abs, tag = 'smem constant byte address 0x4 - core index']
  #allocation1 [shape = 'u32[144,128]{1,0:T(1,128)}', space=vmem, size = 0x12000, scoped, tag = 'internal scratch']
  %s0 = inlined_call_operand.vmem [shape: f32[5,512], index: 0, kind: input, shape index: {}]
  %s1 = inlined_call_operand.vmem [shape: f32[32,5], index: 1, kind: input, shape index: {}]
  %s2 = inlined_call_operand.vmem [shape: f32[512,8], index: 2, kind: input, shape index: {}]
  %s3 = inlined_call_operand.vmem [shape: f32[8,32], index: 3, kind: input, shape index: {}]
  %s4 = inlined_call_operand.vmem [shape: f32[32,32], index: 4, kind: input, shape index: {}]
  %s5 = inlined_call_operand.vmem [shape: f32[3,32], index: 5, kind: input, shape index: {}]
  %s6 = inlined_call_operand.vmem [shape: f32[32,128], index: 6, kind: input, shape index: {}]
  %s7 = inlined_call_operand.vmem [shape: s32[8,1], index: 7, kind: input, shape index: {}]
  %s8 = inlined_call_operand.vmem [shape: f32[8,128], index: 8, kind: output, shape index: {0}]
  %s9 = inlined_call_operand.hbm [shape: f32[1,128], index: 9, kind: output, shape index: {1}]
  %10 = xla_tuple %s8, %s9
  %s11 = sld [smem:[#allocation0]]
  $region50: #{shopee_forward.1} parent=0
    _
  %s13 = ssub.s32 1, %s11
  %s14 = scalar_select 0, %s13, %s11
  $region1: #{shopee_forward.1} parent=0
    #allocation2 [shape = 'u8[512]{0}', space=vmem, size = 0x400, scoped, tag = 'output window, operand 1, single buffered']
    #allocation3 [shape = 's32[1]{0}', space=sflag, size = 0x4, scoped, tag = 'scoped memory for shopee_forward.1']
    %15 = vsyncpa [#allocation3], 0
    // Predicated region
    $region2: #{shopee_forward.1} parent=1 // pred_check
      _
    $region3: #{shopee_forward.1} parent=1 // pred_check_branch
      %17 = sbr.rel (0) target = $region5
    $region4: #{shopee_forward.1} parent=1 // pred_region
      _
    $region5: #{shopee_forward.1} parent=1 // pred_fallthru
      _
    // Predicated region
    $region6: #{shopee_forward.1} parent=1 // pred_check
      _
    $region7: #{shopee_forward.1} parent=1 // pred_check_branch
      %19 = sbr.rel (0) target = $region9
    $region8: #{shopee_forward.1} parent=1 // pred_region
      _
    $region9: #{shopee_forward.1} parent=1 // pred_fallthru
      _
    // Predicated region
    $region10: #{shopee_forward.1} parent=1 // pred_check
      _
    $region11: #{shopee_forward.1} parent=1 // pred_check_branch
      %21 = sbr.rel (0) target = $region13
    $region12: #{shopee_forward.1} parent=1 // pred_region
      _
    $region13: #{shopee_forward.1} parent=1 // pred_fallthru
      _
    // Predicated region
    $region14: #{shopee_forward.1} parent=1 // pred_check
      _
    $region15: #{shopee_forward.1} parent=1 // pred_check_branch
      %23 = sbr.rel (0) target = $region17
    $region16: #{shopee_forward.1} parent=1 // pred_region
      _
    $region17: #{shopee_forward.1} parent=1 // pred_fallthru
      _
    // Predicated region
    $region18: #{shopee_forward.1} parent=1 // pred_check
      _
    $region19: #{shopee_forward.1} parent=1 // pred_check_branch
      %25 = sbr.rel (0) target = $region21
    $region20: #{shopee_forward.1} parent=1 // pred_region
      _
    $region21: #{shopee_forward.1} parent=1 // pred_fallthru
      _
    // Predicated region
    $region22: #{shopee_forward.1} parent=1 // pred_check
      _
    $region23: #{shopee_forward.1} parent=1 // pred_check_branch
      %27 = sbr.rel (0) target = $region25
    $region24: #{shopee_forward.1} parent=1 // pred_region
      _
    $region25: #{shopee_forward.1} parent=1 // pred_fallthru
      _
    // Predicated region
    $region26: #{shopee_forward.1} parent=1 // pred_check
      _
    $region27: #{shopee_forward.1} parent=1 // pred_check_branch
      %29 = sbr.rel (0) target = $region29
    $region28: #{shopee_forward.1} parent=1 // pred_region
      _
    $region29: #{shopee_forward.1} parent=1 // pred_fallthru
      _
    // Predicated region
    $region30: #{shopee_forward.1} parent=1 // pred_check
      _
    $region31: #{shopee_forward.1} parent=1 // pred_check_branch
      %31 = sbr.rel (0) target = $region33
    $region32: #{shopee_forward.1} parent=1 // pred_region
      _
    $region33: #{shopee_forward.1} parent=1 // pred_fallthru
      _
    %v32 = vld [vmem:[%s1] sm:$0xff]
    %v33 = vld [vmem:[%s1 + $0x8] sm:$0xff]
    %v34 = vld [vmem:[%s1 + $0x10] sm:$0xff]
    %v35 = vld [vmem:[%s1 + $0x18] sm:$0xff]
    %v36 = vld [vmem:[%s0] sm:$0x1f]
    %v37 = vld [vmem:[%s0 + $0x8] sm:$0x1f]
    %v38 = vld [vmem:[%s0 + $0x10] sm:$0x1f]
    %v39 = vld [vmem:[%s0 + $0x18] sm:$0x1f]
    %vm40 = vcmask 39936
    %v42 = vsel %vm40, %v32, 0
    %v45 = vsel %vm40, %v33, 0
    %v48 = vsel %vm40, %v34, 0
    %v51 = vsel %vm40, %v35, 0
    %vm53 = vcmask 1044480
    %v55 = vsel %vm53, %v36, 0
    %v58 = vsel %vm53, %v37, 0
    %v61 = vsel %vm53, %v38, 0
    %v64 = vsel %vm53, %v39, 0
    %66 = vmatprep.subr.mxu0 0.0
    %67 = vmatpush1.msra.mxu0 0.0
    %68 = vmatprep.subr.mxu0 0.0
    %69 = vmatpush1.msra.mxu0 0.0
    %70 = vmatprep.subr.mxu0 0.0
    %71 = vmatpush1.msra.mxu0 0.0
    %72 = vmatprep.subr.mxu0 0.0
    %73 = vmatpush1.msra.mxu0 0.0
    %74 = vmatprep.subr.mxu0 0.0
    %75 = vmatpush1.msra.mxu0 0.0
    %76 = vmatprep.subr.mxu0 0.0
    %77 = vmatpush1.msra.mxu0 0.0
    %78 = vmatprep.subr.mxu0 0.0
    %79 = vmatpush1.msra.mxu0 0.0
    %80 = vmatprep.subr.mxu0 0.0
    %81 = vmatpush1.msra.mxu0 0.0
    %82 = vmatprep.subr.mxu0 0.0
    %83 = vmatpush1.msra.mxu0 0.0
    %84 = vmatprep.subr.mxu0 0.0
    %85 = vmatpush1.msra.mxu0 0.0
    %86 = vmatprep.subr.mxu0 0.0
    %87 = vmatpush1.msra.mxu0 0.0
    %88 = vmatprep.subr.mxu0 0.0
    %89 = vmatpush1.msra.mxu0 0.0
    %90 = vmatprep.subr.mxu0 0.0
    %91 = vmatpush1.msra.mxu0 0.0
    %92 = vmatprep.subr.mxu0 0.0
    %93 = vmatpush1.msra.mxu0 0.0
    %94 = vmatprep.subr.mxu0 0.0
    %95 = vmatpush1.msra.mxu0 0.0
    %96 = vmatprep.subr.mxu0 %v58
    %97 = vmatpush1.msra.mxu0 %v55
    %98 = vmatprep.subr.mxu0 0.0
    %99 = vmatpush2.msra.mxu0 0.0
    %100 = vmatprep.subr.mxu0 0.0
    %101 = vmatpush2.msra.mxu0 0.0
    %102 = vmatprep.subr.mxu0 0.0
    %103 = vmatpush2.msra.mxu0 0.0
    %104 = vmatprep.subr.mxu0 0.0
    %105 = vmatpush2.msra.mxu0 0.0
    %106 = vmatprep.subr.mxu0 0.0
    %107 = vmatpush2.msra.mxu0 0.0
    %108 = vmatprep.subr.mxu0 0.0
    %109 = vmatpush2.msra.mxu0 0.0
    %110 = vmatprep.subr.mxu0 0.0
    %111 = vmatpush2.msra.mxu0 0.0
    %112 = vmatprep.subr.mxu0 0.0
    %113 = vmatpush2.msra.mxu0 0.0
    %114 = vmatprep.subr.mxu0 0.0
    %115 = vmatpush2.msra.mxu0 0.0
    %116 = vmatprep.subr.mxu0 0.0
    %117 = vmatpush2.msra.mxu0 0.0
    %118 = vmatprep.subr.mxu0 0.0
    %119 = vmatpush2.msra.mxu0 0.0
    %120 = vmatprep.subr.mxu0 0.0
    %121 = vmatpush2.msra.mxu0 0.0
    %122 = vmatprep.subr.mxu0 0.0
    %123 = vmatpush2.msra.mxu0 0.0
    %124 = vmatprep.subr.mxu0 0.0
    %125 = vmatpush2.msra.mxu0 0.0
    %126 = vmatprep.subr.mxu0 0.0
    %127 = vmatpush2.msra.mxu0 0.0
    %128 = vmatprep.subr.mxu0 0.0
    %129 = vmatpush2.msra.mxu0 0.0
    %130 = vmatprep.mubr.f32.mxu0 0.0
    %131 = vmatmul.mubr.f32.gmra.mxu0 %v42
    %v132 = vpop.f32.mrf.mxu0
    %v133 = vadd.f32 0.0, %v132
    %v134 = vpop.f32.mrf.mxu0
    %v135 = vadd.f32 0.0, %v134
    %136 = vmatprep.mubr.f32.mxu0 0.0
    %137 = vmatmul.mubr.f32.gmra.mxu0 %v45
    %v138 = vpop.f32.mrf.mxu0
    %v139 = vadd.f32 0.0, %v138
    %v140 = vpop.f32.mrf.mxu0
    %v141 = vadd.f32 0.0, %v140
    %142 = vmatprep.mubr.f32.mxu0 0.0
    %143 = vmatmul.mubr.f32.gmra.mxu0 %v48
    %v144 = vpop.f32.mrf.mxu0
    %v145 = vadd.f32 0.0, %v144
    %v146 = vpop.f32.mrf.mxu0
    %v147 = vadd.f32 0.0, %v146
    %148 = vmatprep.mubr.f32.mxu0 0.0
    %149 = vmatmul.mubr.f32.gmra.mxu0 %v51
    %v150 = vpop.f32.mrf.mxu0
    %v151 = vadd.f32 0.0, %v150
    %v152 = vpop.f32.mrf.mxu0
    %v153 = vadd.f32 0.0, %v152
    %154 = vdwg.mxu0
    %155 = vmatprep.subr.mxu0 0.0
    %156 = vmatpush1.msra.mxu0 0.0
    %157 = vmatprep.subr.mxu0 0.0
    %158 = vmatpush1.msra.mxu0 0.0
    %159 = vmatprep.subr.mxu0 0.0
    %160 = vmatpush1.msra.mxu0 0.0
    %161 = vmatprep.subr.mxu0 0.0
    %162 = vmatpush1.msra.mxu0 0.0
    %163 = vmatprep.subr.mxu0 0.0
    %164 = vmatpush1.msra.mxu0 0.0
    %165 = vmatprep.subr.mxu0 0.0
    %166 = vmatpush1.msra.mxu0 0.0
    %167 = vmatprep.subr.mxu0 0.0
    %168 = vmatpush1.msra.mxu0 0.0
    %169 = vmatprep.subr.mxu0 0.0
    %170 = vmatpush1.msra.mxu0 0.0
    %171 = vmatprep.subr.mxu0 0.0
    %172 = vmatpush1.msra.mxu0 0.0
    %173 = vmatprep.subr.mxu0 0.0
    %174 = vmatpush1.msra.mxu0 0.0
    %175 = vmatprep.subr.mxu0 0.0
    %176 = vmatpush1.msra.mxu0 0.0
    %177 = vmatprep.subr.mxu0 0.0
    %178 = vmatpush1.msra.mxu0 0.0
    %179 = vmatprep.subr.mxu0 0.0
    %180 = vmatpush1.msra.mxu0 0.0
    %181 = vmatprep.subr.mxu0 0.0
    %182 = vmatpush1.msra.mxu0 0.0
    %183 = vmatprep.subr.mxu0 0.0
    %184 = vmatpush1.msra.mxu0 0.0
    %185 = vmatprep.subr.mxu0 %v64
    %186 = vmatpush1.msra.mxu0 %v61
    %187 = vmatprep.subr.mxu0 0.0
    %188 = vmatpush2.msra.mxu0 0.0
    %189 = vmatprep.subr.mxu0 0.0
    %190 = vmatpush2.msra.mxu0 0.0
    %191 = vmatprep.subr.mxu0 0.0
    %192 = vmatpush2.msra.mxu0 0.0
    %193 = vmatprep.subr.mxu0 0.0
    %194 = vmatpush2.msra.mxu0 0.0
    %195 = vmatprep.subr.mxu0 0.0
    %196 = vmatpush2.msra.mxu0 0.0
    %197 = vmatprep.subr.mxu0 0.0
    %198 = vmatpush2.msra.mxu0 0.0
    %199 = vmatprep.subr.mxu0 0.0
    %200 = vmatpush2.msra.mxu0 0.0
    %201 = vmatprep.subr.mxu0 0.0
    %202 = vmatpush2.msra.mxu0 0.0
    %203 = vmatprep.subr.mxu0 0.0
    %204 = vmatpush2.msra.mxu0 0.0
    %205 = vmatprep.subr.mxu0 0.0
    %206 = vmatpush2.msra.mxu0 0.0
    %207 = vmatprep.subr.mxu0 0.0
    %208 = vmatpush2.msra.mxu0 0.0
    %209 = vmatprep.subr.mxu0 0.0
    %210 = vmatpush2.msra.mxu0 0.0
    %211 = vmatprep.subr.mxu0 0.0
    %212 = vmatpush2.msra.mxu0 0.0
    %213 = vmatprep.subr.mxu0 0.0
    %214 = vmatpush2.msra.mxu0 0.0
    %215 = vmatprep.subr.mxu0 0.0
    %216 = vmatpush2.msra.mxu0 0.0
    %217 = vmatprep.subr.mxu0 0.0
    %218 = vmatpush2.msra.mxu0 0.0
    %219 = vmatprep.mubr.f32.mxu0 0.0
    %220 = vmatmul.mubr.f32.gmra.mxu0 %v42
    %v221 = vpop.f32.mrf.mxu0
    %v222 = vadd.f32 0.0, %v221
    %v223 = vpop.f32.mrf.mxu0
    %v224 = vadd.f32 0.0, %v223
    %225 = vmatprep.mubr.f32.mxu0 0.0
    %226 = vmatmul.mubr.f32.gmra.mxu0 %v45
    %v227 = vpop.f32.mrf.mxu0
    %v228 = vadd.f32 0.0, %v227
    %v229 = vpop.f32.mrf.mxu0
    %v230 = vadd.f32 0.0, %v229
    %231 = vmatprep.mubr.f32.mxu0 0.0
    %232 = vmatmul.mubr.f32.gmra.mxu0 %v48
    %v233 = vpop.f32.mrf.mxu0
    %v234 = vadd.f32 0.0, %v233
    %v235 = vpop.f32.mrf.mxu0
    %v236 = vadd.f32 0.0, %v235
    %237 = vmatprep.mubr.f32.mxu0 0.0
    %238 = vmatmul.mubr.f32.gmra.mxu0 %v51
    %v239 = vpop.f32.mrf.mxu0
    %v240 = vadd.f32 0.0, %v239
    %v241 = vpop.f32.mrf.mxu0
    %v242 = vadd.f32 0.0, %v241
    %243 = vdwg.mxu0
    %v244 = vmax.f32 %v133, 0.0
    %v245 = vmax.f32 %v135, 0.0
    %v246 = vmax.f32 %v222, 0.0
    %v247 = vmax.f32 %v224, 0.0
    %v248 = vmax.f32 %v139, 0.0
    %v249 = vmax.f32 %v141, 0.0
    %v250 = vmax.f32 %v228, 0.0
    %v251 = vmax.f32 %v230, 0.0
    %v252 = vmax.f32 %v145, 0.0
    %v253 = vmax.f32 %v147, 0.0
    %v254 = vmax.f32 %v234, 0.0
    %v255 = vmax.f32 %v236, 0.0
    %v256 = vmax.f32 %v151, 0.0
    %v257 = vmax.f32 %v153, 0.0
    %v258 = vmax.f32 %v240, 0.0
    %v259 = vmax.f32 %v242, 0.0
    %v260 = vld [vmem:[%s2] sm:$0xff]
    %v261 = vld [vmem:[%s2 + $0x8] sm:$0xff]
    %v262 = vld [vmem:[%s2 + $0x10] sm:$0xff]
    %v263 = vld [vmem:[%s2 + $0x18] sm:$0xff]
    %v264 = vld [vmem:[%s2 + $0x20] sm:$0xff]
    %v265 = vld [vmem:[%s2 + $0x28] sm:$0xff]
    %v266 = vld [vmem:[%s2 + $0x30] sm:$0xff]
    %v267 = vld [vmem:[%s2 + $0x38] sm:$0xff]
    %v268 = vld [vmem:[%s2 + $0x40] sm:$0xff]
    %v269 = vld [vmem:[%s2 + $0x48] sm:$0xff]
    %v270 = vld [vmem:[%s2 + $0x50] sm:$0xff]
    %v271 = vld [vmem:[%s2 + $0x58] sm:$0xff]
    %v272 = vld [vmem:[%s2 + $0x60] sm:$0xff]
    %v273 = vld [vmem:[%s2 + $0x68] sm:$0xff]
    %v274 = vld [vmem:[%s2 + $0x70] sm:$0xff]
    %v275 = vld [vmem:[%s2 + $0x78] sm:$0xff]
    %v276 = vld [vmem:[%s2 + $0x80] sm:$0xff]
    %v277 = vld [vmem:[%s2 + $0x88] sm:$0xff]
    %v278 = vld [vmem:[%s2 + $0x90] sm:$0xff]
    %v279 = vld [vmem:[%s2 + $0x98] sm:$0xff]
    %v280 = vld [vmem:[%s2 + $0xa0] sm:$0xff]
    %v281 = vld [vmem:[%s2 + $0xa8] sm:$0xff]
    %v282 = vld [vmem:[%s2 + $0xb0] sm:$0xff]
    %v283 = vld [vmem:[%s2 + $0xb8] sm:$0xff]
    %v284 = vld [vmem:[%s2 + $0xc0] sm:$0xff]
    %v285 = vld [vmem:[%s2 + $0xc8] sm:$0xff]
    %v286 = vld [vmem:[%s2 + $0xd0] sm:$0xff]
    %v287 = vld [vmem:[%s2 + $0xd8] sm:$0xff]
    %v288 = vld [vmem:[%s2 + $0xe0] sm:$0xff]
    %v289 = vld [vmem:[%s2 + $0xe8] sm:$0xff]
    %v290 = vld [vmem:[%s2 + $0xf0] sm:$0xff]
    %v291 = vld [vmem:[%s2 + $0xf8] sm:$0xff]
    %v292 = vld [vmem:[%s2 + $0x100] sm:$0xff]
    %v293 = vld [vmem:[%s2 + $0x108] sm:$0xff]
    %v294 = vld [vmem:[%s2 + $0x110] sm:$0xff]
    %v295 = vld [vmem:[%s2 + $0x118] sm:$0xff]
    %v296 = vld [vmem:[%s2 + $0x120] sm:$0xff]
    %v297 = vld [vmem:[%s2 + $0x128] sm:$0xff]
    %v298 = vld [vmem:[%s2 + $0x130] sm:$0xff]
    %v299 = vld [vmem:[%s2 + $0x138] sm:$0xff]
    %v300 = vld [vmem:[%s2 + $0x140] sm:$0xff]
    %v301 = vld [vmem:[%s2 + $0x148] sm:$0xff]
    %v302 = vld [vmem:[%s2 + $0x150] sm:$0xff]
    %v303 = vld [vmem:[%s2 + $0x158] sm:$0xff]
    %v304 = vld [vmem:[%s2 + $0x160] sm:$0xff]
    %v305 = vld [vmem:[%s2 + $0x168] sm:$0xff]
    %v306 = vld [vmem:[%s2 + $0x170] sm:$0xff]
    %v307 = vld [vmem:[%s2 + $0x178] sm:$0xff]
    %v308 = vld [vmem:[%s2 + $0x180] sm:$0xff]
    %v309 = vld [vmem:[%s2 + $0x188] sm:$0xff]
    %v310 = vld [vmem:[%s2 + $0x190] sm:$0xff]
    %v311 = vld [vmem:[%s2 + $0x198] sm:$0xff]
    %v312 = vld [vmem:[%s2 + $0x1a0] sm:$0xff]
    %v313 = vld [vmem:[%s2 + $0x1a8] sm:$0xff]
    %v314 = vld [vmem:[%s2 + $0x1b0] sm:$0xff]
    %v315 = vld [vmem:[%s2 + $0x1b8] sm:$0xff]
    %v316 = vld [vmem:[%s2 + $0x1c0] sm:$0xff]
    %v317 = vld [vmem:[%s2 + $0x1c8] sm:$0xff]
    %v318 = vld [vmem:[%s2 + $0x1d0] sm:$0xff]
    %v319 = vld [vmem:[%s2 + $0x1d8] sm:$0xff]
    %v320 = vld [vmem:[%s2 + $0x1e0] sm:$0xff]
    %v321 = vld [vmem:[%s2 + $0x1e8] sm:$0xff]
    %v322 = vld [vmem:[%s2 + $0x1f0] sm:$0xff]
    %v323 = vld [vmem:[%s2 + $0x1f8] sm:$0xff]
    %324 = vmatprep.subr.mxu0 0.0
    %325 = vmatpush1.msra.mxu0 %v275
    %326 = vmatprep.subr.mxu0 0.0
    %327 = vmatpush1.msra.mxu0 %v274
    %328 = vmatprep.subr.mxu0 0.0
    %329 = vmatpush1.msra.mxu0 %v273
    %330 = vmatprep.subr.mxu0 0.0
    %331 = vmatpush1.msra.mxu0 %v272
    %332 = vmatprep.subr.mxu0 0.0
    %333 = vmatpush1.msra.mxu0 %v271
    %334 = vmatprep.subr.mxu0 0.0
    %335 = vmatpush1.msra.mxu0 %v270
    %336 = vmatprep.subr.mxu0 0.0
    %337 = vmatpush1.msra.mxu0 %v269
    %338 = vmatprep.subr.mxu0 0.0
    %339 = vmatpush1.msra.mxu0 %v268
    %340 = vmatprep.subr.mxu0 0.0
    %341 = vmatpush1.msra.mxu0 %v267
    %342 = vmatprep.subr.mxu0 0.0
    %343 = vmatpush1.msra.mxu0 %v266
    %344 = vmatprep.subr.mxu0 0.0
    %345 = vmatpush1.msra.mxu0 %v265
    %346 = vmatprep.subr.mxu0 0.0
    %347 = vmatpush1.msra.mxu0 %v264
    %348 = vmatprep.subr.mxu0 0.0
    %349 = vmatpush1.msra.mxu0 %v263
    %350 = vmatprep.subr.mxu0 0.0
    %351 = vmatpush1.msra.mxu0 %v262
    %352 = vmatprep.subr.mxu0 0.0
    %353 = vmatpush1.msra.mxu0 %v261
    %354 = vmatprep.subr.mxu0 0.0
    %355 = vmatpush1.msra.mxu0 %v260
    %356 = vmatprep.subr.mxu0 0.0
    %357 = vmatpush2.msra.mxu0 %v291
    %358 = vmatprep.subr.mxu0 0.0
    %359 = vmatpush2.msra.mxu0 %v290
    %360 = vmatprep.subr.mxu0 0.0
    %361 = vmatpush2.msra.mxu0 %v289
    %362 = vmatprep.subr.mxu0 0.0
    %363 = vmatpush2.msra.mxu0 %v288
    %364 = vmatprep.subr.mxu0 0.0
    %365 = vmatpush2.msra.mxu0 %v287
    %366 = vmatprep.subr.mxu0 0.0
    %367 = vmatpush2.msra.mxu0 %v286
    %368 = vmatprep.subr.mxu0 0.0
    %369 = vmatpush2.msra.mxu0 %v285
    %370 = vmatprep.subr.mxu0 0.0
    %371 = vmatpush2.msra.mxu0 %v284
    %372 = vmatprep.subr.mxu0 0.0
    %373 = vmatpush2.msra.mxu0 %v283
    %374 = vmatprep.subr.mxu0 0.0
    %375 = vmatpush2.msra.mxu0 %v282
    %376 = vmatprep.subr.mxu0 0.0
    %377 = vmatpush2.msra.mxu0 %v281
    %378 = vmatprep.subr.mxu0 0.0
    %379 = vmatpush2.msra.mxu0 %v280
    %380 = vmatprep.subr.mxu0 0.0
    %381 = vmatpush2.msra.mxu0 %v279
    %382 = vmatprep.subr.mxu0 0.0
    %383 = vmatpush2.msra.mxu0 %v278
    %384 = vmatprep.subr.mxu0 0.0
    %385 = vmatpush2.msra.mxu0 %v277
    %386 = vmatprep.subr.mxu0 0.0
    %387 = vmatpush2.msra.mxu0 %v276
    %388 = vmatprep.mubr.f32.mxu0 %v245
    %389 = vmatmul.mubr.f32.gmra.mxu0 %v244
    %v390 = vpop.f32.mrf.mxu0
    %v391 = vadd.f32 0.0, %v390
    %v392 = vpop.f32.mrf.mxu0
    %393 = vmatprep.mubr.f32.mxu0 %v249
    %394 = vmatmul.mubr.f32.gmra.mxu0 %v248
    %v395 = vpop.f32.mrf.mxu0
    %v396 = vadd.f32 0.0, %v395
    %v397 = vpop.f32.mrf.mxu0
    %398 = vmatprep.mubr.f32.mxu0 %v253
    %399 = vmatmul.mubr.f32.gmra.mxu0 %v252
    %v400 = vpop.f32.mrf.mxu0
    %v401 = vadd.f32 0.0, %v400
    %v402 = vpop.f32.mrf.mxu0
    %403 = vmatprep.mubr.f32.mxu0 %v257
    %404 = vmatmul.mubr.f32.gmra.mxu0 %v256
    %v405 = vpop.f32.mrf.mxu0
    %v406 = vadd.f32 0.0, %v405
    %v407 = vpop.f32.mrf.mxu0
    %408 = vdwg.mxu0
    %409 = vmatprep.subr.mxu0 0.0
    %410 = vmatpush1.msra.mxu0 %v307
    %411 = vmatprep.subr.mxu0 0.0
    %412 = vmatpush1.msra.mxu0 %v306
    %413 = vmatprep.subr.mxu0 0.0
    %414 = vmatpush1.msra.mxu0 %v305
    %415 = vmatprep.subr.mxu0 0.0
    %416 = vmatpush1.msra.mxu0 %v304
    %417 = vmatprep.subr.mxu0 0.0
    %418 = vmatpush1.msra.mxu0 %v303
    %419 = vmatprep.subr.mxu0 0.0
    %420 = vmatpush1.msra.mxu0 %v302
    %421 = vmatprep.subr.mxu0 0.0
    %422 = vmatpush1.msra.mxu0 %v301
    %423 = vmatprep.subr.mxu0 0.0
    %424 = vmatpush1.msra.mxu0 %v300
    %425 = vmatprep.subr.mxu0 0.0
    %426 = vmatpush1.msra.mxu0 %v299
    %427 = vmatprep.subr.mxu0 0.0
    %428 = vmatpush1.msra.mxu0 %v298
    %429 = vmatprep.subr.mxu0 0.0
    %430 = vmatpush1.msra.mxu0 %v297
    %431 = vmatprep.subr.mxu0 0.0
    %432 = vmatpush1.msra.mxu0 %v296
    %433 = vmatprep.subr.mxu0 0.0
    %434 = vmatpush1.msra.mxu0 %v295
    %435 = vmatprep.subr.mxu0 0.0
    %436 = vmatpush1.msra.mxu0 %v294
    %437 = vmatprep.subr.mxu0 0.0
    %438 = vmatpush1.msra.mxu0 %v293
    %439 = vmatprep.subr.mxu0 0.0
    %440 = vmatpush1.msra.mxu0 %v292
    %441 = vmatprep.subr.mxu0 0.0
    %442 = vmatpush2.msra.mxu0 %v323
    %443 = vmatprep.subr.mxu0 0.0
    %444 = vmatpush2.msra.mxu0 %v322
    %445 = vmatprep.subr.mxu0 0.0
    %446 = vmatpush2.msra.mxu0 %v321
    %447 = vmatprep.subr.mxu0 0.0
    %448 = vmatpush2.msra.mxu0 %v320
    %449 = vmatprep.subr.mxu0 0.0
    %450 = vmatpush2.msra.mxu0 %v319
    %451 = vmatprep.subr.mxu0 0.0
    %452 = vmatpush2.msra.mxu0 %v318
    %453 = vmatprep.subr.mxu0 0.0
    %454 = vmatpush2.msra.mxu0 %v317
    %455 = vmatprep.subr.mxu0 0.0
    %456 = vmatpush2.msra.mxu0 %v316
    %457 = vmatprep.subr.mxu0 0.0
    %458 = vmatpush2.msra.mxu0 %v315
    %459 = vmatprep.subr.mxu0 0.0
    %460 = vmatpush2.msra.mxu0 %v314
    %461 = vmatprep.subr.mxu0 0.0
    %462 = vmatpush2.msra.mxu0 %v313
    %463 = vmatprep.subr.mxu0 0.0
    %464 = vmatpush2.msra.mxu0 %v312
    %465 = vmatprep.subr.mxu0 0.0
    %466 = vmatpush2.msra.mxu0 %v311
    %467 = vmatprep.subr.mxu0 0.0
    %468 = vmatpush2.msra.mxu0 %v310
    %469 = vmatprep.subr.mxu0 0.0
    %470 = vmatpush2.msra.mxu0 %v309
    %471 = vmatprep.subr.mxu0 0.0
    %472 = vmatpush2.msra.mxu0 %v308
    %473 = vmatprep.mubr.f32.mxu0 %v247
    %474 = vmatmul.mubr.f32.gmra.mxu0 %v246
    %v475 = vpop.f32.mrf.mxu0
    %v476 = vadd.f32 %v391, %v475
    %v477 = vpop.f32.mrf.mxu0
    %478 = vmatprep.mubr.f32.mxu0 %v251
    %479 = vmatmul.mubr.f32.gmra.mxu0 %v250
    %v480 = vpop.f32.mrf.mxu0
    %v481 = vadd.f32 %v396, %v480
    %v482 = vpop.f32.mrf.mxu0
    %483 = vmatprep.mubr.f32.mxu0 %v255
    %484 = vmatmul.mubr.f32.gmra.mxu0 %v254
    %v485 = vpop.f32.mrf.mxu0
    %v486 = vadd.f32 %v401, %v485
    %v487 = vpop.f32.mrf.mxu0
    %488 = vmatprep.mubr.f32.mxu0 %v259
    %489 = vmatmul.mubr.f32.gmra.mxu0 %v258
    %v490 = vpop.f32.mrf.mxu0
    %v491 = vadd.f32 %v406, %v490
    %v492 = vpop.f32.mrf.mxu0
    %493 = vdwg.mxu0
    %494 = vxpose.xlu0.b32.start [1/16] %v476, 128
    %495 = vxpose.xlu0.b32.cont [2/16] %v481, 128
    %496 = vxpose.xlu0.b32.cont [3/16] %v486, 128
    %497 = vxpose.xlu0.b32.cont [4/16] %v491, 128
    %498 = vxpose.xlu0.b32.cont [5/16] 0.0, 128
    %499 = vxpose.xlu0.b32.cont [6/16] 0.0, 128
    %500 = vxpose.xlu0.b32.cont [7/16] 0.0, 128
    %501 = vxpose.xlu0.b32.cont [8/16] 0.0, 128
    %502 = vxpose.xlu0.b32.cont [9/16] 0.0, 128
    %503 = vxpose.xlu0.b32.cont [10/16] 0.0, 128
    %504 = vxpose.xlu0.b32.cont [11/16] 0.0, 128
    %505 = vxpose.xlu0.b32.cont [12/16] 0.0, 128
    %506 = vxpose.xlu0.b32.cont [13/16] 0.0, 128
    %507 = vxpose.xlu0.b32.cont [14/16] 0.0, 128
    %508 = vxpose.xlu0.b32.cont [15/16] 0.0, 128
    %509 = vxpose.xlu0.b32.end [16/16] 0.0, 128
    %v510 = vpop.trf.xlu0
    %v511 = vpop.trf.xlu0
    %v512 = vpop.trf.xlu0
    %v513 = vpop.trf.xlu0
    %v514 = vpop.trf.xlu0
    %v515 = vpop.trf.xlu0
    %v516 = vpop.trf.xlu0
    %v517 = vpop.trf.xlu0
    %v518 = vpop.trf.xlu0
    %v519 = vpop.trf.xlu0
    %v520 = vpop.trf.xlu0
    %v521 = vpop.trf.xlu0
    %v522 = vpop.trf.xlu0
    %v523 = vpop.trf.xlu0
    %v524 = vpop.trf.xlu0
    %v525 = vpop.trf.xlu0
    %v526 = vld [vmem:[%s3] sm:$0xff]
    %v527 = vmul.f32 %v510, %v526
    %v528 = vld [vmem:[%s5] sm:$0x1]
    %v529 = vld [vmem:[%s5 + $0x1] sm:$0x1]
    %v530 = vld [vmem:[%s5 + $0x2] sm:$0x1]
    %v531 = vld [vmem:[%s4] sm:$0xff]
    %v532 = vld [vmem:[%s4 + $0x8] sm:$0xff]
    %v533 = vld [vmem:[%s4 + $0x10] sm:$0xff]
    %v534 = vld [vmem:[%s4 + $0x18] sm:$0xff]
    %v535 = vlaneseq
    %v536 = vshrl.u32 %v535, 7
    %v537 = vsub.s32 0, %v536
    %v538 = vrot.slane %v528, %v537
    %vm539 = vcmask 261120
    %v541 = vsel %vm539, %v527, 0
    %543 = vmatprep.subr.mxu0 0.0
    %544 = vmatpush1.msra.mxu0 0.0
    %545 = vmatprep.subr.mxu0 0.0
    %546 = vmatpush1.msra.mxu0 0.0
    %547 = vmatprep.subr.mxu0 0.0
    %548 = vmatpush1.msra.mxu0 0.0
    %549 = vmatprep.subr.mxu0 0.0
    %550 = vmatpush1.msra.mxu0 0.0
    %551 = vmatprep.subr.mxu0 0.0
    %552 = vmatpush1.msra.mxu0 0.0
    %553 = vmatprep.subr.mxu0 0.0
    %554 = vmatpush1.msra.mxu0 0.0
    %555 = vmatprep.subr.mxu0 0.0
    %556 = vmatpush1.msra.mxu0 0.0
    %557 = vmatprep.subr.mxu0 0.0
    %558 = vmatpush1.msra.mxu0 0.0
    %559 = vmatprep.subr.mxu0 0.0
    %560 = vmatpush1.msra.mxu0 0.0
    %561 = vmatprep.subr.mxu0 0.0
    %562 = vmatpush1.msra.mxu0 0.0
    %563 = vmatprep.subr.mxu0 0.0
    %564 = vmatpush1.msra.mxu0 0.0
    %565 = vmatprep.subr.mxu0 0.0
    %566 = vmatpush1.msra.mxu0 0.0
    %567 = vmatprep.subr.mxu0 0.0
    %568 = vmatpush1.msra.mxu0 %v534
    %569 = vmatprep.subr.mxu0 0.0
    %570 = vmatpush1.msra.mxu0 %v533
    %571 = vmatprep.subr.mxu0 0.0
    %572 = vmatpush1.msra.mxu0 %v532
    %573 = vmatprep.subr.mxu0 0.0
    %574 = vmatpush1.msra.mxu0 %v531
    %575 = vmatprep.subr.mxu0 0.0
    %576 = vmatpush2.msra.mxu0 0.0
    %577 = vmatprep.subr.mxu0 0.0
    %578 = vmatpush2.msra.mxu0 0.0
    %579 = vmatprep.subr.mxu0 0.0
    %580 = vmatpush2.msra.mxu0 0.0
    %581 = vmatprep.subr.mxu0 0.0
    %582 = vmatpush2.msra.mxu0 0.0
    %583 = vmatprep.subr.mxu0 0.0
    %584 = vmatpush2.msra.mxu0 0.0
    %585 = vmatprep.subr.mxu0 0.0
    %586 = vmatpush2.msra.mxu0 0.0
    %587 = vmatprep.subr.mxu0 0.0
    %588 = vmatpush2.msra.mxu0 0.0
    %589 = vmatprep.subr.mxu0 0.0
    %590 = vmatpush2.msra.mxu0 0.0
    %591 = vmatprep.subr.mxu0 0.0
    %592 = vmatpush2.msra.mxu0 0.0
    %593 = vmatprep.subr.mxu0 0.0
    %594 = vmatpush2.msra.mxu0 0.0
    %595 = vmatprep.subr.mxu0 0.0
    %596 = vmatpush2.msra.mxu0 0.0
    %597 = vmatprep.subr.mxu0 0.0
    %598 = vmatpush2.msra.mxu0 0.0
    %599 = vmatprep.subr.mxu0 0.0
    %600 = vmatpush2.msra.mxu0 0.0
    %601 = vmatprep.subr.mxu0 0.0
    %602 = vmatpush2.msra.mxu0 0.0
    %603 = vmatprep.subr.mxu0 0.0
    %604 = vmatpush2.msra.mxu0 0.0
    %605 = vmatprep.subr.mxu0 0.0
    %606 = vmatpush2.msra.mxu0 0.0
    %607 = vmatprep.mubr.f32.mxu0 0.0
    %608 = vmatmul.mubr.f32.gmra.mxu0 %v541
    %v609 = vpop.f32.mrf.mxu0
    %v610 = vadd.f32 %v538, %v609
    %v611 = vpop.f32.mrf.mxu0
    %612 = vdwg.mxu0
    %v613 = vlaneseq
    %v614 = vshrl.u32 %v613, 7
    %vm615 = vcmp.lt.s32.totalorder %v614, 2
    %v616 = vsel %vm615, 1, 0
    %v617 = vcvt.s32.f32 %v616
    %v618 = vmul.f32 %v610, %v617
    %v619 = vsel %vm539, %v618, 0.0
    %v620 = vrot.slane %v619, 4
    %v621 = vadd.f32 %v619, %v620
    %v622 = vrot.slane %v621, 2
    %v623 = vadd.f32 %v621, %v622
    %v624 = vrot.slane %v623, 1
    %v625 = vadd.f32 %v623, %v624
    %v626 = vmul.f32 %v625, 0.5
    %v627 = vsub.f32 %v610, %v626
    %v628 = vmul.f32 %v627, %v617
    %v629 = vmul.f32 %v628, %v628
    %v630 = vsel %vm539, %v629, 0.0
    %v631 = vrot.slane %v630, 4
    %v632 = vadd.f32 %v630, %v631
    %v633 = vrot.slane %v632, 2
    %v634 = vadd.f32 %v632, %v633
    %v635 = vrot.slane %v634, 1
    %v636 = vadd.f32 %v634, %v635
    %v637 = vmul.f32 %v636, 0.5
    %v638 = vadd.f32 %v637, 1e-05
    %v639 = vrsqrt.pop %v638
    %v640 = vmul.f32 %v627, %v639
    %v641 = vlaneseq
    %v642 = vshrl.u32 %v641, 7
    %v643 = vsub.s32 0, %v642
    %v644 = vrot.slane %v529, %v643
    %v645 = vmul.f32 %v640, %v644
    %v646 = vlaneseq
    %v647 = vshrl.u32 %v646, 7
    %v648 = vsub.s32 0, %v647
    %v649 = vrot.slane %v530, %v648
    %v650 = vadd.f32 %v645, %v649
    %v651 = vld [vmem:[%s6] sm:$0xff]
    %v652 = vld [vmem:[%s6 + $0x8] sm:$0xff]
    %v653 = vld [vmem:[%s6 + $0x10] sm:$0xff]
    %v654 = vld [vmem:[%s6 + $0x18] sm:$0xff]
    %v656 = vsel %vm539, %v650, 0
    %658 = vmatprep.subr.mxu0 0.0
    %659 = vmatpush1.msra.mxu0 0.0
    %660 = vmatprep.subr.mxu0 0.0
    %661 = vmatpush1.msra.mxu0 0.0
    %662 = vmatprep.subr.mxu0 0.0
    %663 = vmatpush1.msra.mxu0 0.0
    %664 = vmatprep.subr.mxu0 0.0
    %665 = vmatpush1.msra.mxu0 0.0
    %666 = vmatprep.subr.mxu0 0.0
    %667 = vmatpush1.msra.mxu0 0.0
    %668 = vmatprep.subr.mxu0 0.0
    %669 = vmatpush1.msra.mxu0 0.0
    %670 = vmatprep.subr.mxu0 0.0
    %671 = vmatpush1.msra.mxu0 0.0
    %672 = vmatprep.subr.mxu0 0.0
    %673 = vmatpush1.msra.mxu0 0.0
    %674 = vmatprep.subr.mxu0 0.0
    %675 = vmatpush1.msra.mxu0 0.0
    %676 = vmatprep.subr.mxu0 0.0
    %677 = vmatpush1.msra.mxu0 0.0
    %678 = vmatprep.subr.mxu0 0.0
    %679 = vmatpush1.msra.mxu0 0.0
    %680 = vmatprep.subr.mxu0 0.0
    %681 = vmatpush1.msra.mxu0 0.0
    %682 = vmatprep.subr.mxu0 0.0
    %683 = vmatpush1.msra.mxu0 %v654
    %684 = vmatprep.subr.mxu0 0.0
    %685 = vmatpush1.msra.mxu0 %v653
    %686 = vmatprep.subr.mxu0 0.0
    %687 = vmatpush1.msra.mxu0 %v652
    %688 = vmatprep.subr.mxu0 0.0
    %689 = vmatpush1.msra.mxu0 %v651
    %690 = vmatprep.subr.mxu0 0.0
    %691 = vmatpush2.msra.mxu0 0.0
    %692 = vmatprep.subr.mxu0 0.0
    %693 = vmatpush2.msra.mxu0 0.0
    %694 = vmatprep.subr.mxu0 0.0
    %695 = vmatpush2.msra.mxu0 0.0
    %696 = vmatprep.subr.mxu0 0.0
    %697 = vmatpush2.msra.mxu0 0.0
    %698 = vmatprep.subr.mxu0 0.0
    %699 = vmatpush2.msra.mxu0 0.0
    %700 = vmatprep.subr.mxu0 0.0
    %701 = vmatpush2.msra.mxu0 0.0
    %702 = vmatprep.subr.mxu0 0.0
    %703 = vmatpush2.msra.mxu0 0.0
    %704 = vmatprep.subr.mxu0 0.0
    %705 = vmatpush2.msra.mxu0 0.0
    %706 = vmatprep.subr.mxu0 0.0
    %707 = vmatpush2.msra.mxu0 0.0
    %708 = vmatprep.subr.mxu0 0.0
    %709 = vmatpush2.msra.mxu0 0.0
    %710 = vmatprep.subr.mxu0 0.0
    %711 = vmatpush2.msra.mxu0 0.0
    %712 = vmatprep.subr.mxu0 0.0
    %713 = vmatpush2.msra.mxu0 0.0
    %714 = vmatprep.subr.mxu0 0.0
    %715 = vmatpush2.msra.mxu0 0.0
    %716 = vmatprep.subr.mxu0 0.0
    %717 = vmatpush2.msra.mxu0 0.0
    %718 = vmatprep.subr.mxu0 0.0
    %719 = vmatpush2.msra.mxu0 0.0
    %720 = vmatprep.subr.mxu0 0.0
    %721 = vmatpush2.msra.mxu0 0.0
    %722 = vmatprep.mubr.f32.mxu0 0.0
    %723 = vmatmul.mubr.f32.gmra.mxu0 %v656
    %v724 = vpop.f32.mrf.mxu0
    %v725 = vadd.f32 0.0, %v724
    %v726 = vpop.f32.mrf.mxu0
    %727 = vdwg.mxu0
    %v728 = vmul.f32 %v650, %v650
    %v729 = vsel %vm539, %v728, 0.0
    %730 = vadd.xlane.f32.xlu0 %v729
    %v731 = vpop.xlane.xlu0 %730
    %v732 = vmax.f32 %v731, 1e-24
    %v733 = vrsqrt.pop %v732
    %v734 = vmul.f32 %v651, %v651
    %v735 = vmul.f32 %v652, %v652
    %v736 = vmul.f32 %v653, %v653
    %v737 = vmul.f32 %v654, %v654
    %v738 = vadd.f32 %v734, %v735
    %v739 = vadd.f32 %v738, %v736
    %v740 = vadd.f32 %v739, %v737
    %v741 = vrot.slane %v740, 4
    %v742 = vadd.f32 %v740, %v741
    %v743 = vrot.slane %v742, 2
    %v744 = vadd.f32 %v742, %v743
    %v745 = vrot.slane %v744, 1
    %v746 = vadd.f32 %v744, %v745
    %v747 = vmax.f32 %v746, 1e-24
    %v748 = vrsqrt.pop %v747
    %v749 = vmul.f32 %v725, %v733
    %v750 = vmul.f32 %v749, %v748
    %v751 = vmul.f32 %v750, %v750
    %v752 = vsub.f32 1.0, %v751
    %v753 = vmax.f32 %v752, 0.0
    %v754 = vrsqrt.pop %v753
    %v755 = vmul.f32 %v753, %v754
    %vm756 = vcmp.eq.f32.partialorder %v753, inf
    %v757 = vsel %vm756, %v753, %v755
    %vm758 = vcmp.eq.f32.partialorder %v753, 0.0
    %v759 = vand.u32 %v753, 2147483648
    %v760 = vsel %vm758, %v759, %v757
    %v761 = vmul.f32 %v750, 0.87758255
    %v762 = vmul.f32 %v760, 0.47942555
    %v763 = vsub.f32 %v761, %v762
    %vm764 = vcmp.gt.f32.partialorder %v750, -0.87758255
    %v765 = vsub.f32 %v750, 0.23971277
    %v766 = vsel %vm764, %v763, %v765
    %v767 = vld [vmem:[%s7] sm:$0xff]
    %v768 = vlaneseq
    %v769 = vand.u32 %v768, 127
    %770 = vset.pattern.permute.xlu0 0
    %771 = vperm.xlu0 %770, %v767
    %v772 = vpop.permute.xlu0 %771
    %vm773 = vcmp.eq.s32.totalorder %v769, %v772
    %v774 = vsel %vm773, 1, 0
    %v775 = vcvt.s32.f32 %v774
    %v776 = vmul.f32 %v775, %v766
    %v777 = vsub.f32 1.0, %v775
    %v778 = vmul.f32 %v777, %v750
    %v779 = vadd.f32 %v776, %v778
    %v780 = vmul.f32 %v779, 30.0
    %781 = vst [vmem:[%s8] sm:$0xff] %v780
    %782 = vmax.xlane.f32.xlu0 %v780
    %v783 = vpop.xlane.xlu0 %782
    %v784 = vsub.f32 %v780, %v783
    %v785 = vmul.f32 %v784, 1.442695
    %v786 = vpow.pop %v785
    %787 = vadd.xlane.f32.xlu0 %v786
    %v788 = vpop.xlane.xlu0 %787
    %v789 = vlog2.pop %v788
    %v790 = vmul.f32 %v789, 0.6931472
    %v791 = vadd.f32 %v783, %v790
    %v792 = vmul.f32 %v780, %v775
    %793 = vadd.xlane.f32.xlu0 %v792
    %v794 = vpop.xlane.xlu0 %793
    %v795 = vsub.f32 %v791, %v794
    %v796 = vmul.f32 %v795, %v617
    %v797 = vrot.slane %v796, 4
    %v798 = vadd.f32 %v796, %v797
    %v799 = vrot.slane %v798, 2
    %v800 = vadd.f32 %v798, %v799
    %v801 = vrot.slane %v800, 1
    %v802 = vadd.f32 %v800, %v801
    %v803 = vmul.f32 %v802, 0.5
    %804 = vst [vmem:[#allocation2] sm:$0x1] %v803
    // Predicated region
    $region34: #{shopee_forward.1} parent=1 // pred_check
      _
    $region35: #{shopee_forward.1} parent=1 // pred_check_branch
      %806 = sbr.rel (0) target = $region37
    $region36: #{shopee_forward.1} parent=1 // pred_region
      _
    $region37: #{shopee_forward.1} parent=1 // pred_fallthru
      _
    // Predicated region
    $region38: #{shopee_forward.1} parent=1 // pred_check
      _
    $region39: #{shopee_forward.1} parent=1 // pred_check_branch
      %808 = sbr.rel (0) target = $region41
    $region40: #{shopee_forward.1} parent=1 // pred_region
      %s810 = ssub.s32 16, 16
      %811 = vsyncadd [#allocation3], %s810
      %s813 = sshll.u32 [#allocation2], 4
      %s814 = int_to_ptr.vmem [resolvable:$true] %s813
      %816 = dma.vmem_to_hbm [thread:$0]  %s814, 16, %s9, [#allocation3]
    $region41: #{shopee_forward.1} parent=1 // pred_fallthru
      _
    // Predicated region
    $region42: #{shopee_forward.1} parent=1 // pred_check
      _
    $region43: #{shopee_forward.1} parent=1 // pred_check_branch
      %818 = sbr.rel (0) target = $region45
    $region44: #{shopee_forward.1} parent=1 // pred_region
      _
    $region45: #{shopee_forward.1} parent=1 // pred_fallthru
      _
    // Predicated region
    $region46: #{shopee_forward.1} parent=1 // pred_check
      _
    $region47: #{shopee_forward.1} parent=1 // pred_check_branch
      %820 = sbr.rel (0) target = $region49
    $region48: #{shopee_forward.1} parent=1 // pred_region
      %821 = dma.done [#allocation3], 16
    $region49: #{shopee_forward.1} parent=1 // pred_fallthru
      _
    %822 = vsyncpa [#allocation3], 1

</llo_original>
